<compile_context>
chip_gen: v5e
topology: v5e:2x2
jax: 0.10.0
libtpu: 0.0.40
codegen_flags: <defaults>
</compile_context>

<pallas_src>
from functools import partial

import jax
import jax.numpy as jnp
from jax.experimental import pallas as pl
from jax.experimental.pallas import tpu as pltpu


def _round_up(x, m):
    return (x + m - 1) // m * m


def _min_sublane_tile(dtype):
    itemsize = jnp.dtype(dtype).itemsize
    if itemsize >= 4:
        return 8
    if itemsize == 2:
        return 16
    return 32


def _vmem_capacity_bytes():
    try:
        return int(pltpu.get_tpu_info().vmem_capacity_bytes)
    except Exception:
        return 64 * 1024 * 1024  # conservative fallback (v7x per-TC VMEM)


def _choose_tile_m(M_pad, K, Np, in_bytes, w_bytes, out_bytes, budget_bytes, min_tile):
    """M-tile: large enough to amortize per-step overhead, small enough to (a) fit the
    VMEM budget with double-buffered in/out tiles plus the (double-buffered) resident
    weight, and (b) keep >= 2 (ideally >= 4) grid steps for pipelining / v7x megacore."""
    # Weight/bias are resident but the pipeline still allocates 2 buffers per spec.
    fixed = 2 * K * Np * w_bytes + 2 * Np * 4 + (2 << 20)
    target_steps = 4 if M_pad >= 4 * min_tile else 2
    tm = min(1024, _round_up(pl.cdiv(M_pad, target_steps), min_tile))
    tm = max(min_tile, tm)
    while tm > min_tile:
        need = fixed + 2 * tm * K * in_bytes + 2 * tm * Np * out_bytes
        if need <= budget_bytes:
            break
        tm = max(min_tile, _round_up(tm // 2, min_tile))
    return min(tm, M_pad)


def _patch_embed_kernel(x_ref, w_ref, b_ref, o_ref):
    # x_ref: (tm, K), w_ref: (K, Np), b_ref: (1, Np) f32, o_ref: (tm, Np).
    # bf16 operands -> MXU accumulates in f32; bias add in f32; cast on store.
    acc = jnp.dot(x_ref[...], w_ref[...], preferred_element_type=jnp.float32)
    o_ref[...] = (acc + b_ref[...]).astype(o_ref.dtype)


def prepare_patch_embed_params(weight, bias, compute_dtype=jnp.bfloat16):
    """Repack the Conv2d weight (N, C, p, p) -> (K, Np) and bias -> (1, Np) once, at
    parameter-prep time (not inside the jitted forward).  N is padded to a 128
    multiple only when necessary so the output store path stays lane-dense."""
    N, C, ph, pw = weight.shape
    K = C * ph * pw
    Np = N if N % 128 == 0 else _round_up(N, 128)
    w2d = weight.reshape(N, K).T.astype(compute_dtype)
    b1d = bias.astype(jnp.float32)
    if Np != N:
        w2d = jnp.pad(w2d, ((0, 0), (0, Np - N)))
        b1d = jnp.pad(b1d, (0, Np - N))
    return w2d, b1d.reshape(1, Np)


@partial(jax.jit, static_argnames=("patch_size", "embed_dim"))
def patch_embed_forward(x, w2d, b2d, *, patch_size, embed_dim):
    """x: (B, C, H, W) NCHW; (w2d, b2d) from prepare_patch_embed_params.

    Returns (B, num_patches, embed_dim), matching
    `self.proj(x).flatten(2).transpose(1, 2)` in the PyTorch module.
    """
    B, C, H, W = x.shape
    p = patch_size
    N = embed_dim
    gh, gw = H // p, W // p
    num_patches = gh * gw
    K = C * p * p
    M = B * num_patches
    Np = w2d.shape[1]
    compute_dtype = w2d.dtype
    out_dtype = x.dtype

    min_tile = _min_sublane_tile(compute_dtype)
    M_pad = _round_up(M, min_tile)          # pad only to the sublane floor

    in_bytes = jnp.dtype(compute_dtype).itemsize
    out_bytes = jnp.dtype(out_dtype).itemsize
    vmem_cap = _vmem_capacity_bytes()
    tm = _choose_tile_m(M_pad, K, Np, in_bytes, in_bytes, out_bytes,
                        budget_bytes=int(vmem_cap * 0.6), min_tile=min_tile)
    grid_m = pl.cdiv(M_pad, tm)             # last block may be partial

    # --- glue: non-overlapping patch extraction (channel-major K, like the conv) ---
    # Cast first so the single materialized transpose copy moves bf16; pad M by at
    # most min_tile-1 zero rows; never pad K.
    # TODO(synk): fold this transpose into the Pallas input DMA (allow_input_fusion
    # or a strided BlockSpec gather over NCHW with in-kernel K-packing) to remove
    # the remaining extra HBM pass over x.
    xp = x.astype(compute_dtype).reshape(B, C, gh, p, gw, p)
    patches = jnp.transpose(xp, (0, 2, 4, 1, 3, 5)).reshape(M, K)
    if M_pad != M:
        patches = jnp.pad(patches, ((0, M_pad - M), (0, 0)))

    vmem_limit = min(int(vmem_cap * 3 // 4), 96 * 1024 * 1024)

    # TODO(synk): if the patches DMA is still exposed in traces on v6e, spend spare
    # VMEM on pipeline_mode=pl.Buffered(3) for the patches spec instead of a larger
    # tile; on v7x an fp8 patches/weight path (scale folded into the bias epilogue)
    # would halve HBM traffic again.
    out = pl.pallas_call(
        _patch_embed_kernel,
        out_shape=jax.ShapeDtypeStruct((M_pad, Np), out_dtype),
        grid_spec=pltpu.PrefetchScalarGridSpec(
            num_scalar_prefetch=0,
            grid=(grid_m,),
            in_specs=[
                pl.BlockSpec((tm, K), lambda i: (i, 0)),    # streamed patch rows
                pl.BlockSpec((K, Np), lambda i: (0, 0)),    # VMEM-resident weight
                pl.BlockSpec((1, Np), lambda i: (0, 0)),    # VMEM-resident bias
            ],
            out_specs=pl.BlockSpec((tm, Np), lambda i: (i, 0)),
        ),
        compiler_params=pltpu.CompilerParams(
            dimension_semantics=("parallel",),   # independent rows -> v7x megacore
            vmem_limit_bytes=vmem_limit,
        ),
    )(patches, w2d, b2d)

    if M_pad != M or Np != N:
        out = out[:M, :N]
    return out.reshape(B, num_patches, N)


if __name__ == "__main__":
    # Small shapes consistent with the module: img_size=16, patch_size=4,
    # in_chans=4, embed_dim=32, batch=2.
    B, C, H, W = 2, 4, 16, 16
    patch_size = 4
    embed_dim = 32

    key = jax.random.PRNGKey(0)
    kx, kw, kb = jax.random.split(key, 3)

    x = jax.random.normal(kx, (B, C, H, W), dtype=jnp.float32)
    weight = jax.random.normal(kw, (embed_dim, C, patch_size, patch_size),
                               dtype=jnp.float32) * 0.02
    bias = jax.random.normal(kb, (embed_dim,), dtype=jnp.float32) * 0.02

    # Pure-JAX reference (lax conv, NCHW like PyTorch).
    ref = jax.lax.conv_general_dilated(
        x, weight, window_strides=(patch_size, patch_size), padding="VALID",
        dimension_numbers=("NCHW", "OIHW", "NCHW"))
    ref = ref + bias.reshape(1, embed_dim, 1, 1)
    ref = ref.reshape(B, embed_dim, -1).transpose(0, 2, 1)

    num_patches = (H // patch_size) * (W // patch_size)

    # Exact-precision path (f32 compute) — tight tolerance.
    w32, b32 = prepare_patch_embed_params(weight, bias, compute_dtype=jnp.float32)
    out32 = patch_embed_forward(x, w32, b32, patch_size=patch_size, embed_dim=embed_dim)
    out32 = jax.block_until_ready(out32)
    assert out32.shape == (B, num_patches, embed_dim), out32.shape
    assert jnp.allclose(out32, ref, atol=1e-4, rtol=1e-4), "f32 path mismatch vs reference"

    # Default optimized path (bf16 compute, f32 accumulation/output) — loose tolerance.
    wbf, bbf = prepare_patch_embed_params(weight, bias, compute_dtype=jnp.bfloat16)
    outbf = patch_embed_forward(x, wbf, bbf, patch_size=patch_size, embed_dim=embed_dim)
    outbf = jax.block_until_ready(outbf)
    assert outbf.shape == (B, num_patches, embed_dim), outbf.shape
    assert jnp.allclose(outbf, ref, atol=3e-2, rtol=3e-2), "bf16 path mismatch vs reference"

    print("KERNEL_OK")
</pallas_src>

<mosaic_0001>
module attributes {stable_mosaic.version = 11 : i64} {
  func.func @_patch_embed_kernel(%arg0: i32, %arg1: memref<8x64xf32, #tpu.memory_space<vmem>>, %arg2: memref<64x128xf32, #tpu.memory_space<vmem>>, %arg3: memref<1x128xf32, #tpu.memory_space<vmem>>, %arg4: memref<8x128xf32, #tpu.memory_space<vmem>>) attributes {dimension_semantics = [#tpu.dimension_semantics<parallel>], iteration_bounds = array<i64: 4>, scalar_prefetch = 0 : i64, scratch_operands = 0 : i64, tpu.core_type = #tpu.core_type<tc>, window_params = [{transform_indices = @transform_0, window_bounds = array<i64: 8, 64>}, {pipeline_mode = #tpu.pipeline_mode<synchronous>, transform_indices = @transform_1, window_bounds = array<i64: 64, 128>}, {pipeline_mode = #tpu.pipeline_mode<synchronous>, transform_indices = @transform_2, window_bounds = array<i64: 1, 128>}, {transform_indices = @transform_3, window_bounds = array<i64: 8, 128>}]} {
    %c0 = arith.constant 0 : index
    %c0_0 = arith.constant 0 : index
    %0 = vector.load %arg1[%c0, %c0_0] : memref<8x64xf32, #tpu.memory_space<vmem>>, vector<8x64xf32>
    %c0_1 = arith.constant 0 : index
    %c0_2 = arith.constant 0 : index
    %1 = vector.load %arg2[%c0_1, %c0_2] : memref<64x128xf32, #tpu.memory_space<vmem>>, vector<64x128xf32>
    %cst = arith.constant dense<0.000000e+00> : vector<8x128xf32>
    %2 = tpu.matmul %0, %1, %cst {dimension_numbers = #tpu.dot_dimension_numbers<[1], [0], [0], [1], [0, 0, 1, 1], [], []>} : vector<8x64xf32>, vector<64x128xf32>, vector<8x128xf32> -> vector<8x128xf32>
    %c0_3 = arith.constant 0 : index
    %c0_4 = arith.constant 0 : index
    %3 = vector.load %arg3[%c0_3, %c0_4] : memref<1x128xf32, #tpu.memory_space<vmem>>, vector<1x128xf32>
    %4 = vector.broadcast %3 : vector<1x128xf32> to vector<8x128xf32>
    %5 = arith.addf %2, %4 : vector<8x128xf32>
    %c0_5 = arith.constant 0 : index
    %c0_6 = arith.constant 0 : index
    %6 = vector.load %arg4[%c0_5, %c0_6] : memref<8x128xf32, #tpu.memory_space<vmem>>, vector<8x128xf32>
    tpu.vector_store %arg4[%c0_5, %c0_6], %5 {strides = array<i32>} : memref<8x128xf32, #tpu.memory_space<vmem>>, vector<8x128xf32>,
    return
  }
  func.func @transform_0(%arg0: i32) -> (i32, i32) {
    %c0_i32 = arith.constant 0 : i32
    %c0_i32_0 = arith.constant 0 : i32
    return %arg0, %c0_i32 : i32, i32
  }
  func.func @transform_1(%arg0: i32) -> (i32, i32) {
    %c0_i32 = arith.constant 0 : i32
    %c0_i32_0 = arith.constant 0 : i32
    %c0_i32_1 = arith.constant 0 : i32
    return %c0_i32, %c0_i32_0 : i32, i32
  }
  func.func @transform_2(%arg0: i32) -> (i32, i32) {
    %c0_i32 = arith.constant 0 : i32
    %c0_i32_0 = arith.constant 0 : i32
    %c0_i32_1 = arith.constant 0 : i32
    return %c0_i32, %c0_i32_0 : i32, i32
  }
  func.func @transform_3(%arg0: i32) -> (i32, i32) {
    %c0_i32 = arith.constant 0 : i32
    %c0_i32_0 = arith.constant 0 : i32
    return %arg0, %c0_i32 : i32, i32
  }
}

</mosaic_0001>

<llo_original>
// kernel: patch_embed_forward.1
$region0: #{patch_embed_forward.1}
  #allocation0 [shape = 'u32[]', space=smem, size = 0x4, offset = 0x4, fixed_abs, tag = 'smem constant byte address 0x4 - core index']
  #allocation1 [shape = 'u32[72,128]{1,0:T(1,128)}', space=vmem, size = 0x9000, scoped, tag = 'internal scratch']
  %s0 = inlined_call_operand.vmem [shape: f32[32,64], index: 0, kind: input, shape index: {}]
  %s1 = inlined_call_operand.vmem [shape: f32[64,128], index: 1, kind: input, shape index: {}]
  %s2 = inlined_call_operand.vmem [shape: f32[1,128], index: 2, kind: input, shape index: {}]
  %s3 = inlined_call_operand.hbm [shape: f32[32,128], index: 3, kind: output, shape index: {}]
  %s4 = sld [smem:[#allocation0]]
  $region45: #{patch_embed_forward.1} parent=0
    _
  %s6 = ssub.s32 1, %s4
  %s7 = scalar_select 0, %s6, %s4
  $region1: #{patch_embed_forward.1} parent=0
    #allocation2 [shape = 'u8[8192]{0}', space=vmem, size = 0x2000, scoped, tag = 'output window, operand 0']
    #allocation3 [shape = 's32[2]{0}', space=sflag, size = 0x8, scoped, tag = 'scoped memory for patch_embed_forward.1']
    %8 = vsyncpa [#allocation3], 0
    %s9 = scalar_lea.sflag [#allocation3], 1
    %10 = vsyncpa %s9, 0
    loop: start=0, step=1, limit=6
    $region2: #{patch_embed_forward.1} parent=1 // loop_pre_header
      _
    $region3: #{patch_embed_forward.1} parent=1 // loop_header
      %s12 = sphi 0, %s16
      %p13 = scmp.ge.s32.totalorder %s12, 6
      %s22 = sphi 0, %s24
      %s25 = sphi 0, %s22
      %s26 = sphi 0, %s25
      %s42 = sphi 0, %s26
      %s46 = sphi 0, %s46
      %s48 = sphi 0, %s46
      %s49 = sphi 0, %s48
      %s63 = sphi 0, %s49
      %s67 = sphi 0, %s67
      %s69 = sphi 0, %s67
      %s70 = sphi 0, %s69
      %s84 = sphi 0, %s70
      %s90 = sphi 0, %s92
      %s93 = sphi 0, %s90
      %s94 = sphi 0, %s93
      %s110 = sphi 0, %s94
    $region4: #{patch_embed_forward.1} parent=1 // loop_header_branch
      %15 = sbr.rel (%p13) target = $region8
    $region5: #{patch_embed_forward.1} parent=1 // loop_body
      %s17 = ssub.s32 %s12, 1
      %s18 = ssub.s32 %s12, 2
      %s19 = sadd.s32 %s12, 1
      %s20 = ssub.s32 %s12, %s19
      %p21 = scmp.eq.s32.totalorder %s20, 0
      %s23 = sadd.s32 %s22, 1
      %s24 = scalar_select %p21, %s22, %s23
      %p27 = pneg %p21
      %p28 = scmp.eq.s32.totalorder %s12, 3
      %p29 = por %p27, %p28
      %p30 = scmp.ne.s32.totalorder %s22, %s25
      %p31 = scmp.eq.s32.totalorder %s12, 0
      %p32 = por %p30, %p31
      %p33 = scmp.ne.s32.totalorder %s22, %s25
      %p34 = scmp.eq.s32.totalorder %s17, 3
      %p35 = por %p33, %p34
      %p36 = scmp.ne.s32.totalorder %s25, %s26
      %p37 = scmp.eq.s32.totalorder %s17, 0
      %p38 = por %p36, %p37
      %p39 = scmp.ne.s32.totalorder %s25, %s26
      %p40 = scmp.eq.s32.totalorder %s18, 3
      %p41 = por %p39, %p40
      %p43 = scmp.ne.s32.totalorder %s26, %s42
      %p44 = scmp.eq.s32.totalorder %s18, 0
      %p45 = por %p43, %p44
      %s47 = sadd.s32 %s46, 1
      %p50 = scmp.eq.s32.totalorder %s12, 3
      %p51 = scmp.ne.s32.totalorder %s46, %s48
      %p52 = scmp.eq.s32.totalorder %s12, 0
      %p53 = por %p51, %p52
      %p54 = scmp.ne.s32.totalorder %s46, %s48
      %p55 = scmp.eq.s32.totalorder %s17, 3
      %p56 = por %p54, %p55
      %p57 = scmp.ne.s32.totalorder %s48, %s49
      %p58 = scmp.eq.s32.totalorder %s17, 0
      %p59 = por %p57, %p58
      %p60 = scmp.ne.s32.totalorder %s48, %s49
      %p61 = scmp.eq.s32.totalorder %s18, 3
      %p62 = por %p60, %p61
      %p64 = scmp.ne.s32.totalorder %s49, %s63
      %p65 = scmp.eq.s32.totalorder %s18, 0
      %p66 = por %p64, %p65
      %s68 = sadd.s32 %s67, 1
      %p71 = scmp.eq.s32.totalorder %s12, 3
      %p72 = scmp.ne.s32.totalorder %s67, %s69
      %p73 = scmp.eq.s32.totalorder %s12, 0
      %p74 = por %p72, %p73
      %p75 = scmp.ne.s32.totalorder %s67, %s69
      %p76 = scmp.eq.s32.totalorder %s17, 3
      %p77 = por %p75, %p76
      %p78 = scmp.ne.s32.totalorder %s69, %s70
      %p79 = scmp.eq.s32.totalorder %s17, 0
      %p80 = por %p78, %p79
      %p81 = scmp.ne.s32.totalorder %s69, %s70
      %p82 = scmp.eq.s32.totalorder %s18, 3
      %p83 = por %p81, %p82
      %p85 = scmp.ne.s32.totalorder %s70, %s84
      %p86 = scmp.eq.s32.totalorder %s18, 0
      %p87 = por %p85, %p86
      %s88 = ssub.s32 %s12, %s19
      %p89 = scmp.eq.s32.totalorder %s88, 0
      %s91 = sadd.s32 %s90, 1
      %s92 = scalar_select %p89, %s90, %s91
      %p95 = pneg %p89
      %p96 = scmp.eq.s32.totalorder %s12, 3
      %p97 = por %p95, %p96
      %p98 = scmp.ne.s32.totalorder %s90, %s93
      %p99 = scmp.eq.s32.totalorder %s12, 0
      %p100 = por %p98, %p99
      %p101 = scmp.ne.s32.totalorder %s90, %s93
      %p102 = scmp.eq.s32.totalorder %s17, 3
      %p103 = por %p101, %p102
      %p104 = scmp.ne.s32.totalorder %s93, %s94
      %p105 = scmp.eq.s32.totalorder %s17, 0
      %p106 = por %p104, %p105
      %p107 = scmp.ne.s32.totalorder %s93, %s94
      %p108 = scmp.eq.s32.totalorder %s18, 3
      %p109 = por %p107, %p108
      %p111 = scmp.ne.s32.totalorder %s94, %s110
      %p112 = scmp.eq.s32.totalorder %s18, 0
      %p113 = por %p111, %p112
      %p114 = scmp.le.s32.totalorder 1, %s12
      %p115 = scmp.lt.s32.totalorder %s12, 5
      %p116 = pnand %p114, %p115
      %p117 = pneg %p116
      // Predicated region
      $region9: #{patch_embed_forward.1} parent=5 // pred_check
        _
      $region10: #{patch_embed_forward.1} parent=5 // pred_check_branch
        %119 = sbr.rel (%p116) target = $region12
      $region11: #{patch_embed_forward.1} parent=5 // pred_region
        %s120 = ssub.s32 %s12, 1
        // Predicated region
        $region13: #{patch_embed_forward.1} parent=11 // pred_check
          %p121 = pneg %p59
        $region14: #{patch_embed_forward.1} parent=11 // pred_check_branch
          %123 = sbr.rel (%p121) target = $region16
        $region15: #{patch_embed_forward.1} parent=11 // pred_region
          _
        $region16: #{patch_embed_forward.1} parent=11 // pred_fallthru
          _
        // Predicated region
        $region17: #{patch_embed_forward.1} parent=11 // pred_check
          %p124 = pneg %p80
        $region18: #{patch_embed_forward.1} parent=11 // pred_check_branch
          %126 = sbr.rel (%p124) target = $region20
        $region19: #{patch_embed_forward.1} parent=11 // pred_region
          _
        $region20: #{patch_embed_forward.1} parent=11 // pred_fallthru
          _
      $region12: #{patch_embed_forward.1} parent=5 // pred_fallthru
        _
      %p127 = scmp.lt.s32.totalorder %s12, 4
      // Predicated region
      $region21: #{patch_embed_forward.1} parent=5 // pred_check
        %p128 = pneg %p127
      $region22: #{patch_embed_forward.1} parent=5 // pred_check_branch
        %130 = sbr.rel (%p128) target = $region24
      $region23: #{patch_embed_forward.1} parent=5 // pred_region
        // Predicated region
        $region25: #{patch_embed_forward.1} parent=23 // pred_check
          %p131 = pneg %p32
        $region26: #{patch_embed_forward.1} parent=23 // pred_check_branch
          %133 = sbr.rel (%p131) target = $region28
        $region27: #{patch_embed_forward.1} parent=23 // pred_region
          %p134 = scmp.lt.s32.totalorder %s12, 3
          %s135 = scalar_select %p134, %s12, 3
          %s136 = smul.addr %s135, 8
          %s137 = scalar_lea.vmem %s0, %s136
        $region28: #{patch_embed_forward.1} parent=23 // pred_fallthru
          _
      $region24: #{patch_embed_forward.1} parent=5 // pred_fallthru
        _
      %p138 = scmp.le.s32.totalorder 1, %s12
      %p139 = scmp.lt.s32.totalorder %s12, 5
      %p140 = pnand %p138, %p139
      %p141 = pneg %p140
      // Predicated region
      $region29: #{patch_embed_forward.1} parent=5 // pred_check
        _
      $region30: #{patch_embed_forward.1} parent=5 // pred_check_branch
        %143 = sbr.rel (%p140) target = $region32
      $region31: #{patch_embed_forward.1} parent=5 // pred_region
        %s144 = ssub.s32 %s12, 1
        %p145 = scmp.lt.s32.totalorder %s17, 3
        %s146 = scalar_select %p145, %s17, 3
        %s147 = smul.addr %s146, 8
        %s148 = scalar_lea.vmem %s0, %s147
        %p149 = pneg %p38
        %p150 = pneg %p35
        %p151 = pneg %p59
        %p152 = pneg %p56
        %p153 = pneg %p80
        %p154 = pneg %p77
        %p155 = pneg %p106
        %p156 = pneg %p103
        %s157 = sand.u32 %s93, 1
        %s158 = scalar_lea.sflag [#allocation3], %s157
        %s159 = sand.u32 %s93, 1
        %s160 = smul.addr %s159, 8
        %s161 = scalar_lea.vmem [#allocation2], %s160
        %p162 = scmp.lt.s32.totalorder %s17, 3
        %s163 = scalar_select %p162, %s17, 3
        %s164 = smul.addr %s163, 8
        %s165 = scalar_lea.vmem %s0, %s164
        %v166 = vld [vmem:[%s165] sm:$0xff]
        %v167 = vld [vmem:[%s1] sm:$0xff]
        %v168 = vld [vmem:[%s1 + $0x8] sm:$0xff]
        %v169 = vld [vmem:[%s1 + $0x10] sm:$0xff]
        %v170 = vld [vmem:[%s1 + $0x18] sm:$0xff]
        %v171 = vld [vmem:[%s1 + $0x20] sm:$0xff]
        %v172 = vld [vmem:[%s1 + $0x28] sm:$0xff]
        %v173 = vld [vmem:[%s1 + $0x30] sm:$0xff]
        %v174 = vld [vmem:[%s1 + $0x38] sm:$0xff]
        %v175 = vld [vmem:[%s2] sm:$0x1]
        %v177 = vperm.slane %v175, 0
        %vm179 = vcmask 523264
        %v181 = vsel %vm179, %v166, 0
        %183 = vmatpush.msra.mxu0 0.0
        %184 = vmatpush.msra.mxu0 0.0
        %185 = vmatpush.msra.mxu0 0.0
        %186 = vmatpush.msra.mxu0 0.0
        %187 = vmatpush.msra.mxu0 0.0
        %188 = vmatpush.msra.mxu0 0.0
        %189 = vmatpush.msra.mxu0 0.0
        %190 = vmatpush.msra.mxu0 0.0
        %191 = vmatpush.msra.mxu0 %v174
        %192 = vmatpush.msra.mxu0 %v173
        %193 = vmatpush.msra.mxu0 %v172
        %194 = vmatpush.msra.mxu0 %v171
        %195 = vmatpush.msra.mxu0 %v170
        %196 = vmatpush.msra.mxu0 %v169
        %197 = vmatpush.msra.mxu0 %v168
        %198 = vmatpush.msra.mxu0 %v167
        %199 = vmatmul.f32.gmra.mxu0 %v181
        %v200 = vpop.f32.mrf.mxu0
        %v201 = vadd.f32 %v177, %v200
        %202 = vdwg.mxu0
        %203 = vst [vmem:[%s161] sm:$0xff] %v201
        %s204 = sand.u32 %s93, 1
        %s205 = scalar_lea.sflag [#allocation3], %s204
        %s206 = sand.u32 %s93, 1
        %s207 = smul.addr %s206, 8
        %s208 = scalar_lea.vmem [#allocation2], %s207
        // Predicated region
        $region33: #{patch_embed_forward.1} parent=31 // pred_check
          %p209 = pneg %p103
        $region34: #{patch_embed_forward.1} parent=31 // pred_check_branch
          %211 = sbr.rel (%p209) target = $region36
        $region35: #{patch_embed_forward.1} parent=31 // pred_region
          %213 = vsyncadd %s205, 0
          %s214 = smul.addr %s17, 8
          %s215 = scalar_lea.hbm %s3, %s214
          %s217 = sshll.u32 %s208, 4
          %s218 = int_to_ptr.vmem [resolvable:$true] %s217
          %s219 = sshll.u32 %s215, 4
          %s220 = int_to_ptr.hbm [resolvable:$true] %s219
          %222 = dma.vmem_to_hbm [thread:$0]  %s218, 128, %s220, %s205
        $region36: #{patch_embed_forward.1} parent=31 // pred_fallthru
          _
      $region32: #{patch_embed_forward.1} parent=5 // pred_fallthru
        _
      %p223 = scmp.le.s32.totalorder 2, %s12
      // Predicated region
      $region37: #{patch_embed_forward.1} parent=5 // pred_check
        %p224 = pneg %p223
      $region38: #{patch_embed_forward.1} parent=5 // pred_check_branch
        %226 = sbr.rel (%p224) target = $region40
      $region39: #{patch_embed_forward.1} parent=5 // pred_region
        %s227 = ssub.s32 %s12, 2
        // Predicated region
        $region41: #{patch_embed_forward.1} parent=39 // pred_check
          %p228 = pneg %p109
        $region42: #{patch_embed_forward.1} parent=39 // pred_check_branch
          %230 = sbr.rel (%p228) target = $region44
        $region43: #{patch_embed_forward.1} parent=39 // pred_region
          %s231 = sand.u32 %s94, 1
          %s232 = scalar_lea.sflag [#allocation3], %s231
          %s233 = sand.u32 %s94, 1
          %s234 = smul.addr %s233, 8
          %s235 = scalar_lea.vmem [#allocation2], %s234
          %237 = dma.done %s232, 128
        $region44: #{patch_embed_forward.1} parent=39 // pred_fallthru
          _
      $region40: #{patch_embed_forward.1} parent=5 // pred_fallthru
        _
    $region6: #{patch_embed_forward.1} parent=1 // loop_footer
      %s16 = sadd.s32 1, %s12
    $region7: #{patch_embed_forward.1} parent=1 // loop_footer_branch
      %11 = sbr.rel target = $region3
    $region8: #{patch_embed_forward.1} parent=1 // loop_exit
      _
    %238 = vsyncpa [#allocation3], 1
    %s239 = scalar_lea.sflag [#allocation3], 1
    %240 = vsyncpa %s239, 1

</llo_original>
